<compile_context>
chip_gen: v7x
topology: tpu7x:2x2x1
jax: 0.10.0
libtpu: 0.0.40
codegen_flags: <defaults>
</compile_context>

<pallas_src>
import functools

import jax
import jax.numpy as jnp
from jax.experimental import pallas as pl
from jax.experimental.pallas import tpu as pltpu


def _ceil_to(v, m):
    return ((v + m - 1) // m) * m


# ---------------------------------------------------------------------------
# Fused single-launch kernel: whole feature map resident in VMEM.
# ---------------------------------------------------------------------------
def _se_fused_kernel(x_ref, w1_ref, b1_ref, w2_ref, b2_ref, y_ref, *, inv_hw):
    # x_ref/y_ref: (B, C, HW)  w1_ref: (C, Cr)  b1_ref: (1, Cr)
    # w2_ref: (Cr, C)          b2_ref: (1, C)
    v = jnp.sum(x_ref[...].astype(jnp.float32), axis=-1) * inv_hw      # (B, C)
    h = jnp.dot(v, w1_ref[...], preferred_element_type=jnp.float32)
    h = jnp.maximum(h + b1_ref[...], 0.0)                              # ReLU
    s = jnp.dot(h, w2_ref[...], preferred_element_type=jnp.float32)
    s = jax.nn.sigmoid(s + b2_ref[...])                                # (B, C)
    # Scale in x's native dtype (bf16-native VPU on v6e/v7x; exact for f32).
    y_ref[...] = x_ref[...] * s[:, :, None].astype(x_ref.dtype)


# ---------------------------------------------------------------------------
# Streaming fallback, pass 1: tiled global-avg-pool + excitation MLP.
# ---------------------------------------------------------------------------
def _pool_mlp_kernel(x_ref, w1_ref, b1_ref, w2_ref, b2_ref, score_ref,
                     acc_ref, *, inv_hw):
    # x_ref: (B, C, Ts)  score_ref: (B, C)  acc_ref: (B, C) f32 scratch
    t = pl.program_id(0)

    @pl.when(t == 0)
    def _():
        acc_ref[...] = jnp.zeros_like(acc_ref)

    # Partial spatial sum for this tile (accumulate in f32).
    acc_ref[...] += jnp.sum(x_ref[...].astype(jnp.float32), axis=-1)

    @pl.when(t == pl.num_programs(0) - 1)
    def _():
        v = acc_ref[...] * inv_hw                                      # (B, C)
        h = jnp.dot(v, w1_ref[...], preferred_element_type=jnp.float32)
        h = jnp.maximum(h + b1_ref[...], 0.0)                          # ReLU
        s = jnp.dot(h, w2_ref[...], preferred_element_type=jnp.float32)
        score_ref[...] = jax.nn.sigmoid(s + b2_ref[...])               # (B, C)


# ---------------------------------------------------------------------------
# Streaming fallback, pass 2: per-channel scale  y = x * score.
# ---------------------------------------------------------------------------
def _scale_kernel(score_ref, x_ref, y_ref):
    # score_ref: (B, C) f32 (stays resident)   x_ref/y_ref: (B, C, Ts)
    s = score_ref[...].astype(x_ref.dtype)
    y_ref[...] = x_ref[...] * s[:, :, None]


def _choose_spatial_tile(hw, bc_bytes, budget_bytes=8 * 1024 * 1024):
    """Largest spatial tile (multiple of 128, dividing hw) whose
    double-buffered in+out blocks stay within ~budget_bytes."""
    max_ts = max(128, budget_bytes // max(1, 4 * bc_bytes))
    if hw <= max_ts:
        return hw                      # whole spatial extent in one block
    ts = (max_ts // 128) * 128
    while ts >= 128:
        if hw % ts == 0:
            return ts
        ts -= 128
    return hw                          # fallback: single (possibly large) block


def se_block(x, w1, b1, w2, b2, *, force_two_pass=False):
    """x: (B, C, H, W); w1: (Cr, C) PyTorch layout; b1: (Cr,);
    w2: (C, Cr); b2: (C,). Returns (B, C, H, W)."""
    B, C, H, W = x.shape
    Cr = w1.shape[0]
    HW = H * W

    # Lane-dense layout: fold spatial dims so the last dim maps to lanes.
    xf = x.reshape(B, C, HW)

    # Pre-transpose weights to (in, out); 2-D biases for TPU layout.
    w1t = jnp.asarray(w1, jnp.float32).T            # (C, Cr)
    b1r = jnp.asarray(b1, jnp.float32).reshape(1, Cr)
    w2t = jnp.asarray(w2, jnp.float32).T            # (Cr, C)
    b2r = jnp.asarray(b2, jnp.float32).reshape(1, C)

    itemsize = xf.dtype.itemsize
    # VMEM footprint of one (in or out) copy of x, with (8,128) tile padding.
    padded_x_bytes = B * _ceil_to(C, 8) * _ceil_to(HW, 128) * itemsize

    # ---- fused single-launch path: 1 HBM read + 1 HBM write of x ----------
    FUSED_BUDGET = 32 * 1024 * 1024        # in + out resident copies of x
    if (not force_two_pass) and (2 * padded_x_bytes <= FUSED_BUDGET):
        yf = pl.pallas_call(
            functools.partial(_se_fused_kernel, inv_hw=1.0 / HW),
            out_shape=jax.ShapeDtypeStruct((B, C, HW), x.dtype),
            compiler_params=pltpu.CompilerParams(
                vmem_limit_bytes=48 * 1024 * 1024),
        )(xf, w1t, b1r, w2t, b2r)
        return yf.reshape(B, C, H, W)

    # ---- streaming two-pass fallback for large feature maps ---------------
    ts = _choose_spatial_tile(HW, B * _ceil_to(C, 8) * itemsize)
    n_tiles = HW // ts
    vmem_limit = 32 * 1024 * 1024  # raise v5e's 16 MiB default; safe on v7x

    # pass 1: pooled channel vector + excitation MLP for the whole batch
    score = pl.pallas_call(
        functools.partial(_pool_mlp_kernel, inv_hw=1.0 / HW),
        out_shape=jax.ShapeDtypeStruct((B, C), jnp.float32),
        grid_spec=pltpu.PrefetchScalarGridSpec(
            num_scalar_prefetch=0,
            grid=(n_tiles,),
            in_specs=[
                pl.BlockSpec((B, C, ts), lambda t: (0, 0, t)),
                pl.BlockSpec((C, Cr), lambda t: (0, 0)),
                pl.BlockSpec((1, Cr), lambda t: (0, 0)),
                pl.BlockSpec((Cr, C), lambda t: (0, 0)),
                pl.BlockSpec((1, C), lambda t: (0, 0)),
            ],
            out_specs=pl.BlockSpec((B, C), lambda t: (0, 0)),
            scratch_shapes=[pltpu.VMEM((B, C), jnp.float32)],
        ),
        compiler_params=pltpu.CompilerParams(
            dimension_semantics=("arbitrary",),   # spatial reduction axis
            vmem_limit_bytes=vmem_limit),
    )(xf, w1t, b1r, w2t, b2r)

    # pass 2: streaming scale, parallel over spatial tiles
    # TODO(synk): sweep pipeline_mode=pl.Buffered(3) on the x input if a
    # profile shows exposed DMA for small tiles.
    yf = pl.pallas_call(
        _scale_kernel,
        out_shape=jax.ShapeDtypeStruct((B, C, HW), x.dtype),
        grid_spec=pltpu.PrefetchScalarGridSpec(
            num_scalar_prefetch=0,
            grid=(n_tiles,),
            in_specs=[
                pl.BlockSpec((B, C), lambda t: (0, 0)),          # stays resident
                pl.BlockSpec((B, C, ts), lambda t: (0, 0, t)),
            ],
            out_specs=pl.BlockSpec((B, C, ts), lambda t: (0, 0, t)),
        ),
        compiler_params=pltpu.CompilerParams(
            dimension_semantics=("parallel",),    # both TCs on v7x
            vmem_limit_bytes=vmem_limit),
    )(score, xf)

    return yf.reshape(B, C, H, W)


def se_block_reference(x, w1, b1, w2, b2):
    """Pure-JAX reference replicating the PyTorch forward."""
    v = jnp.mean(x.astype(jnp.float32), axis=(2, 3))                 # (B, C)
    h = jnp.maximum(v @ w1.T + b1, 0.0)                              # (B, Cr)
    s = jax.nn.sigmoid(h @ w2.T + b2)                                # (B, C)
    return (x.astype(jnp.float32) * s[:, :, None, None]).astype(x.dtype)


if __name__ == "__main__":
    # Shapes consistent with SEBlock(in_channels=4, reduction_ratio=2)
    B, C, H, W = 2, 4, 16, 16
    reduction_ratio = 2
    Cr = C // reduction_ratio

    key = jax.random.PRNGKey(0)
    kx, k1, k2, k3, k4 = jax.random.split(key, 5)

    x = jax.random.normal(kx, (B, C, H, W), dtype=jnp.float32)

    # Deterministic Linear init (uniform +/- 1/sqrt(fan_in), like PyTorch).
    bound1 = 1.0 / (C ** 0.5)
    w1 = jax.random.uniform(k1, (Cr, C), jnp.float32, -bound1, bound1)
    b1 = jax.random.uniform(k2, (Cr,), jnp.float32, -bound1, bound1)
    bound2 = 1.0 / (Cr ** 0.5)
    w2 = jax.random.uniform(k3, (C, Cr), jnp.float32, -bound2, bound2)
    b2 = jax.random.uniform(k4, (C,), jnp.float32, -bound2, bound2)

    y_ref = se_block_reference(x, w1, b1, w2, b2)

    # Fused single-launch path (the default for small feature maps).
    y_fused = jax.block_until_ready(se_block(x, w1, b1, w2, b2))
    assert y_fused.shape == (B, C, H, W)
    assert jnp.allclose(y_fused, y_ref, atol=1e-5, rtol=1e-5), \
        "fused path mismatch vs reference"

    # Streaming two-pass path (fallback for feature maps larger than VMEM),
    # exercised here at small shape to validate both code paths.
    y_stream = jax.block_until_ready(
        se_block(x, w1, b1, w2, b2, force_two_pass=True))
    assert y_stream.shape == (B, C, H, W)
    assert jnp.allclose(y_stream, y_ref, atol=1e-5, rtol=1e-5), \
        "streaming path mismatch vs reference"

    print("KERNEL_OK")
</pallas_src>

<mosaic_0001>
module attributes {stable_mosaic.version = 11 : i64} {
  func.func @_se_fused_kernel(%arg0: memref<2x4x256xf32, #tpu.memory_space<vmem>>, %arg1: memref<4x2xf32, #tpu.memory_space<vmem>>, %arg2: memref<1x2xf32, #tpu.memory_space<vmem>>, %arg3: memref<2x4xf32, #tpu.memory_space<vmem>>, %arg4: memref<1x4xf32, #tpu.memory_space<vmem>>, %arg5: memref<2x4x256xf32, #tpu.memory_space<vmem>>) attributes {dimension_semantics = [], scalar_prefetch = 0 : i64, scratch_operands = 0 : i64, tpu.core_type = #tpu.core_type<tc>} {
    %c0 = arith.constant 0 : index
    %c0_0 = arith.constant 0 : index
    %c0_1 = arith.constant 0 : index
    %0 = vector.load %arg0[%c0, %c0_0, %c0_1] : memref<2x4x256xf32, #tpu.memory_space<vmem>>, vector<2x4x256xf32>
    %cst = arith.constant dense<0.000000e+00> : vector<2x4xf32>
    %1 = vector.multi_reduction <add>, %0, %cst [2] : vector<2x4x256xf32> to vector<2x4xf32>
    %cst_2 = arith.constant 3.906250e-03 : f32
    %2 = vector.broadcast %cst_2 : f32 to vector<2x4xf32>
    %3 = arith.mulf %1, %2 : vector<2x4xf32>
    %c0_3 = arith.constant 0 : index
    %c0_4 = arith.constant 0 : index
    %4 = vector.load %arg1[%c0_3, %c0_4] : memref<4x2xf32, #tpu.memory_space<vmem>>, vector<4x2xf32>
    %cst_5 = arith.constant dense<0.000000e+00> : vector<2x2xf32>
    %5 = tpu.matmul %3, %4, %cst_5 {dimension_numbers = #tpu.dot_dimension_numbers<[1], [0], [0], [1], [0, 0, 1, 1], [], []>} : vector<2x4xf32>, vector<4x2xf32>, vector<2x2xf32> -> vector<2x2xf32>
    %c0_6 = arith.constant 0 : index
    %c0_7 = arith.constant 0 : index
    %6 = vector.load %arg2[%c0_6, %c0_7] : memref<1x2xf32, #tpu.memory_space<vmem>>, vector<1x2xf32>
    %7 = vector.broadcast %6 : vector<1x2xf32> to vector<2x2xf32>
    %8 = arith.addf %5, %7 : vector<2x2xf32>
    %cst_8 = arith.constant 0.000000e+00 : f32
    %9 = vector.broadcast %cst_8 : f32 to vector<2x2xf32>
    %10 = arith.maximumf %8, %9 : vector<2x2xf32>
    %c0_9 = arith.constant 0 : index
    %c0_10 = arith.constant 0 : index
    %11 = vector.load %arg3[%c0_9, %c0_10] : memref<2x4xf32, #tpu.memory_space<vmem>>, vector<2x4xf32>
    %cst_11 = arith.constant dense<0.000000e+00> : vector<2x4xf32>
    %12 = tpu.matmul %10, %11, %cst_11 {dimension_numbers = #tpu.dot_dimension_numbers<[1], [0], [0], [1], [0, 0, 1, 1], [], []>} : vector<2x2xf32>, vector<2x4xf32>, vector<2x4xf32> -> vector<2x4xf32>
    %c0_12 = arith.constant 0 : index
    %c0_13 = arith.constant 0 : index
    %13 = vector.load %arg4[%c0_12, %c0_13] : memref<1x4xf32, #tpu.memory_space<vmem>>, vector<1x4xf32>
    %14 = vector.broadcast %13 : vector<1x4xf32> to vector<2x4xf32>
    %15 = arith.addf %12, %14 : vector<2x4xf32>
    %16 = arith.negf %15 : vector<2x4xf32>
    %17 = math.exp %16 : vector<2x4xf32>
    %cst_14 = arith.constant 1.000000e+00 : f32
    %18 = vector.broadcast %cst_14 : f32 to vector<2x4xf32>
    %19 = arith.addf %18, %17 : vector<2x4xf32>
    %20 = arith.divf %18, %19 : vector<2x4xf32>
    %c0_15 = arith.constant 0 : index
    %c0_16 = arith.constant 0 : index
    %c0_17 = arith.constant 0 : index
    %21 = vector.load %arg0[%c0_15, %c0_16, %c0_17] : memref<2x4x256xf32, #tpu.memory_space<vmem>>, vector<2x4x256xf32>
    %22 = vector.shape_cast %20 : vector<2x4xf32> to vector<2x4x1xf32>
    %23 = vector.broadcast %22 : vector<2x4x1xf32> to vector<2x4x256xf32>
    %24 = arith.mulf %21, %23 : vector<2x4x256xf32>
    %c0_18 = arith.constant 0 : index
    %c0_19 = arith.constant 0 : index
    %c0_20 = arith.constant 0 : index
    %25 = vector.load %arg5[%c0_18, %c0_19, %c0_20] : memref<2x4x256xf32, #tpu.memory_space<vmem>>, vector<2x4x256xf32>
    tpu.vector_store %arg5[%c0_18, %c0_19, %c0_20], %24 {strides = array<i32>} : memref<2x4x256xf32, #tpu.memory_space<vmem>>, vector<2x4x256xf32>,
    return
  }
}

</mosaic_0001>

<llo_original>
// kernel: tpu_custom_call.1
$region0: #{tpu_custom_call.1}
  #allocation0 [shape = 'u32[]', space=smem, size = 0x4, offset = 0x4, fixed_abs, tag = 'smem constant byte address 0x4 - core index']
  #allocation1 [shape = 'u32[144,128]{1,0:T(1,128)}', space=vmem, size = 0x12000, scoped, tag = 'internal scratch']
  %s0 = inlined_call_operand.hbm [shape: f32[2,4,256], index: 0, kind: input, shape index: {}]
  %s1 = inlined_call_operand.vmem [shape: f32[4,2], index: 1, kind: input, shape index: {}]
  %s2 = inlined_call_operand.vmem [shape: f32[1,2], index: 2, kind: input, shape index: {}]
  %s3 = inlined_call_operand.vmem [shape: f32[2,4], index: 3, kind: input, shape index: {}]
  %s4 = inlined_call_operand.vmem [shape: f32[1,4], index: 4, kind: input, shape index: {}]
  %s5 = inlined_call_operand.hbm [shape: f32[2,4,256], index: 5, kind: output, shape index: {}]
  %s6 = sld [smem:[#allocation0]]
  $region34: #{tpu_custom_call.1} parent=0
    _
  %s8 = ssub.s32 1, %s6
  %s9 = scalar_select 0, %s8, %s6
  $region1: #{tpu_custom_call.1} parent=0
    #allocation2 [shape = 'u8[8192]{0}', space=vmem, size = 0x2000, scoped, tag = 'input window, operand 0, single buffered']
    #allocation3 [shape = 's32[1]{0}', space=sflag, size = 0x4, scoped, tag = 'scoped memory for tpu_custom_call.1']
    #allocation4 [shape = 's32[1]{0}', space=sflag, size = 0x4, scoped, tag = 'scoped memory for tpu_custom_call.1']
    #allocation5 [shape = 'u8[8192]{0}', space=vmem, size = 0x2000, scoped, tag = 'output window, operand 0, single buffered']
    %10 = vsyncpa [#allocation3], 0
    %11 = vsyncpa [#allocation4], 0
    // Predicated region
    $region2: #{tpu_custom_call.1} parent=1 // pred_check
      _
    $region3: #{tpu_custom_call.1} parent=1 // pred_check_branch
      %13 = sbr.rel (0) target = $region5
    $region4: #{tpu_custom_call.1} parent=1 // pred_region
      %s15 = ssub.s32 256, 256
      %16 = vsyncadd [#allocation3], %s15
      %s17 = sshll.u32 [#allocation2], 4
      %s18 = int_to_ptr.vmem [resolvable:$true] %s17
      %23 = dma.hbm_to_vmem [thread:$0]  %s0, 256, %s18, [#allocation3], 128, 128, 8
    $region5: #{tpu_custom_call.1} parent=1 // pred_fallthru
      _
    // Predicated region
    $region6: #{tpu_custom_call.1} parent=1 // pred_check
      _
    $region7: #{tpu_custom_call.1} parent=1 // pred_check_branch
      %25 = sbr.rel (0) target = $region9
    $region8: #{tpu_custom_call.1} parent=1 // pred_region
      _
    $region9: #{tpu_custom_call.1} parent=1 // pred_fallthru
      _
    // Predicated region
    $region10: #{tpu_custom_call.1} parent=1 // pred_check
      _
    $region11: #{tpu_custom_call.1} parent=1 // pred_check_branch
      %27 = sbr.rel (0) target = $region13
    $region12: #{tpu_custom_call.1} parent=1 // pred_region
      _
    $region13: #{tpu_custom_call.1} parent=1 // pred_fallthru
      _
    // Predicated region
    $region14: #{tpu_custom_call.1} parent=1 // pred_check
      _
    $region15: #{tpu_custom_call.1} parent=1 // pred_check_branch
      %29 = sbr.rel (0) target = $region17
    $region16: #{tpu_custom_call.1} parent=1 // pred_region
      _
    $region17: #{tpu_custom_call.1} parent=1 // pred_fallthru
      _
    // Predicated region
    $region18: #{tpu_custom_call.1} parent=1 // pred_check
      _
    $region19: #{tpu_custom_call.1} parent=1 // pred_check_branch
      %31 = sbr.rel (0) target = $region21
    $region20: #{tpu_custom_call.1} parent=1 // pred_region
      _
    $region21: #{tpu_custom_call.1} parent=1 // pred_fallthru
      _
    // Predicated region
    $region22: #{tpu_custom_call.1} parent=1 // pred_check
      _
    $region23: #{tpu_custom_call.1} parent=1 // pred_check_branch
      %33 = sbr.rel (0) target = $region25
    $region24: #{tpu_custom_call.1} parent=1 // pred_region
      %34 = dma.done [#allocation3], 256
    $region25: #{tpu_custom_call.1} parent=1 // pred_fallthru
      _
    %v35 = vld [vmem:[#allocation2] sm:$0xff]
    %v36 = vld [vmem:[#allocation2 + $0x8] sm:$0xff]
    %v39 = vcombine.high %v35, %v35
    %v40 = vcombine.high %v36, %v36
    %vm43 = vcmask 1043456
    %v44 = vsel %vm43, %v35, 0.0
    %v45 = vsel %vm43, %v39, 0.0
    %v46 = vadd.f32 %v44, %v45
    %47 = vadd.xlane.f32.xlu0 %v46
    %v48 = vpop.xlane.xlu0 %47
    %v49 = vsel %vm43, %v36, 0.0
    %v50 = vsel %vm43, %v40, 0.0
    %v51 = vadd.f32 %v49, %v50
    %52 = vadd.xlane.f32.xlu0 %v51
    %v53 = vpop.xlane.xlu0 %52
    %v54 = vmul.f32 %v48, 0.00390625
    %v55 = vmul.f32 %v53, 0.00390625
    %v56 = vld [vmem:[%s1] sm:$0xf]
    %v57 = vld [vmem:[%s2] sm:$0x1]
    %v59 = vlaneseq
    %v60 = vshrl.u32 %v59, 7
    %v61 = vsub.s32 0, %v60
    %v62 = vrot.slane %v57, %v61
    %v66 = vlaneseq
    %v67 = vand.u32 %v66, 127
    %v68 = vlaneseq
    %v69 = vshrl.u32 %v68, 7
    %v70 = vsub.s32 %v67, %v69
    %v71 = vrot.slane %v54, %v70
    %v72 = vlaneseq
    %v73 = vshrl.u32 %v72, 7
    %v74 = vsub.s32 %v67, %v73
    %v75 = vrot.slane %v55, %v74
    %vm76 = vcmask 1041409
    %v77 = vsel %vm76, %v75, %v71
    %vm78 = vcmask 31744
    %v79 = vsel %vm78, %v77, 0
    %v82 = vsel %vm43, %v56, 0
    %84 = vmatprep.subr.mxu0 0.0
    %85 = vmatpush1.msra.mxu0 %v82
    %86 = vmatprep.subr.mxu0 0.0
    %87 = vmatpush1.msra.mxu0 0.0
    %88 = vmatprep.subr.mxu0 0.0
    %89 = vmatpush1.msra.mxu0 0.0
    %90 = vmatprep.subr.mxu0 0.0
    %91 = vmatpush1.msra.mxu0 0.0
    %92 = vmatprep.subr.mxu0 0.0
    %93 = vmatpush1.msra.mxu0 0.0
    %94 = vmatprep.subr.mxu0 0.0
    %95 = vmatpush1.msra.mxu0 0.0
    %96 = vmatprep.subr.mxu0 0.0
    %97 = vmatpush1.msra.mxu0 0.0
    %98 = vmatprep.subr.mxu0 0.0
    %99 = vmatpush1.msra.mxu0 0.0
    %100 = vmatprep.subr.mxu0 0.0
    %101 = vmatpush1.msra.mxu0 0.0
    %102 = vmatprep.subr.mxu0 0.0
    %103 = vmatpush1.msra.mxu0 0.0
    %104 = vmatprep.subr.mxu0 0.0
    %105 = vmatpush1.msra.mxu0 0.0
    %106 = vmatprep.subr.mxu0 0.0
    %107 = vmatpush1.msra.mxu0 0.0
    %108 = vmatprep.subr.mxu0 0.0
    %109 = vmatpush1.msra.mxu0 0.0
    %110 = vmatprep.subr.mxu0 0.0
    %111 = vmatpush1.msra.mxu0 0.0
    %112 = vmatprep.subr.mxu0 0.0
    %113 = vmatpush1.msra.mxu0 0.0
    %114 = vmatprep.subr.mxu0 0.0
    %115 = vmatpush1.msra.mxu0 0.0
    %116 = vmatprep.subr.mxu0 0.0
    %117 = vmatpush1.msra.mxu0 0.0
    %118 = vmatprep.subr.mxu0 0.0
    %119 = vmatpush1.msra.mxu0 0.0
    %120 = vmatprep.subr.mxu0 0.0
    %121 = vmatpush1.msra.mxu0 0.0
    %122 = vmatprep.subr.mxu0 0.0
    %123 = vmatpush1.msra.mxu0 0.0
    %124 = vmatprep.subr.mxu0 0.0
    %125 = vmatpush1.msra.mxu0 0.0
    %126 = vmatprep.subr.mxu0 0.0
    %127 = vmatpush1.msra.mxu0 0.0
    %128 = vmatprep.subr.mxu0 0.0
    %129 = vmatpush1.msra.mxu0 0.0
    %130 = vmatprep.subr.mxu0 0.0
    %131 = vmatpush1.msra.mxu0 0.0
    %132 = vmatprep.subr.mxu0 0.0
    %133 = vmatpush1.msra.mxu0 0.0
    %134 = vmatprep.subr.mxu0 0.0
    %135 = vmatpush1.msra.mxu0 0.0
    %136 = vmatprep.subr.mxu0 0.0
    %137 = vmatpush1.msra.mxu0 0.0
    %138 = vmatprep.subr.mxu0 0.0
    %139 = vmatpush1.msra.mxu0 0.0
    %140 = vmatprep.subr.mxu0 0.0
    %141 = vmatpush1.msra.mxu0 0.0
    %142 = vmatprep.subr.mxu0 0.0
    %143 = vmatpush1.msra.mxu0 0.0
    %144 = vmatprep.subr.mxu0 0.0
    %145 = vmatpush1.msra.mxu0 0.0
    %146 = vmatprep.subr.mxu0 0.0
    %147 = vmatpush1.msra.mxu0 0.0
    %148 = vmatprep.mubr.f32.mxu0 0.0
    %149 = vmatmul.mubr.f32.gmra.mrb[0].mxu0 %v79
    %v150 = vpop.f32.mrb[0].mxu0
    %v151 = vadd.f32 %v62, %v150
    %v152 = vpop.f32.mrb[0].mxu0
    %153 = vdwg.mxu0
    %v154 = vmax.f32 %v151, 0.0
    %v155 = vld [vmem:[%s3] sm:$0x3]
    %v156 = vld [vmem:[%s4] sm:$0x1]
    %v158 = vlaneseq
    %v159 = vshrl.u32 %v158, 7
    %v160 = vsub.s32 0, %v159
    %v161 = vrot.slane %v156, %v160
    %vm163 = vcmask 15360
    %v165 = vsel %vm163, %v154, 0
    %vm167 = vcmask 1041408
    %v169 = vsel %vm167, %v155, 0
    %171 = vmatprep.subr.mxu0 0.0
    %172 = vmatpush1.msra.mxu0 %v169
    %173 = vmatprep.subr.mxu0 0.0
    %174 = vmatpush1.msra.mxu0 0.0
    %175 = vmatprep.subr.mxu0 0.0
    %176 = vmatpush1.msra.mxu0 0.0
    %177 = vmatprep.subr.mxu0 0.0
    %178 = vmatpush1.msra.mxu0 0.0
    %179 = vmatprep.subr.mxu0 0.0
    %180 = vmatpush1.msra.mxu0 0.0
    %181 = vmatprep.subr.mxu0 0.0
    %182 = vmatpush1.msra.mxu0 0.0
    %183 = vmatprep.subr.mxu0 0.0
    %184 = vmatpush1.msra.mxu0 0.0
    %185 = vmatprep.subr.mxu0 0.0
    %186 = vmatpush1.msra.mxu0 0.0
    %187 = vmatprep.subr.mxu0 0.0
    %188 = vmatpush1.msra.mxu0 0.0
    %189 = vmatprep.subr.mxu0 0.0
    %190 = vmatpush1.msra.mxu0 0.0
    %191 = vmatprep.subr.mxu0 0.0
    %192 = vmatpush1.msra.mxu0 0.0
    %193 = vmatprep.subr.mxu0 0.0
    %194 = vmatpush1.msra.mxu0 0.0
    %195 = vmatprep.subr.mxu0 0.0
    %196 = vmatpush1.msra.mxu0 0.0
    %197 = vmatprep.subr.mxu0 0.0
    %198 = vmatpush1.msra.mxu0 0.0
    %199 = vmatprep.subr.mxu0 0.0
    %200 = vmatpush1.msra.mxu0 0.0
    %201 = vmatprep.subr.mxu0 0.0
    %202 = vmatpush1.msra.mxu0 0.0
    %203 = vmatprep.subr.mxu0 0.0
    %204 = vmatpush1.msra.mxu0 0.0
    %205 = vmatprep.subr.mxu0 0.0
    %206 = vmatpush1.msra.mxu0 0.0
    %207 = vmatprep.subr.mxu0 0.0
    %208 = vmatpush1.msra.mxu0 0.0
    %209 = vmatprep.subr.mxu0 0.0
    %210 = vmatpush1.msra.mxu0 0.0
    %211 = vmatprep.subr.mxu0 0.0
    %212 = vmatpush1.msra.mxu0 0.0
    %213 = vmatprep.subr.mxu0 0.0
    %214 = vmatpush1.msra.mxu0 0.0
    %215 = vmatprep.subr.mxu0 0.0
    %216 = vmatpush1.msra.mxu0 0.0
    %217 = vmatprep.subr.mxu0 0.0
    %218 = vmatpush1.msra.mxu0 0.0
    %219 = vmatprep.subr.mxu0 0.0
    %220 = vmatpush1.msra.mxu0 0.0
    %221 = vmatprep.subr.mxu0 0.0
    %222 = vmatpush1.msra.mxu0 0.0
    %223 = vmatprep.subr.mxu0 0.0
    %224 = vmatpush1.msra.mxu0 0.0
    %225 = vmatprep.subr.mxu0 0.0
    %226 = vmatpush1.msra.mxu0 0.0
    %227 = vmatprep.subr.mxu0 0.0
    %228 = vmatpush1.msra.mxu0 0.0
    %229 = vmatprep.subr.mxu0 0.0
    %230 = vmatpush1.msra.mxu0 0.0
    %231 = vmatprep.subr.mxu0 0.0
    %232 = vmatpush1.msra.mxu0 0.0
    %233 = vmatprep.subr.mxu0 0.0
    %234 = vmatpush1.msra.mxu0 0.0
    %235 = vmatprep.mubr.f32.mxu0 0.0
    %236 = vmatmul.mubr.f32.gmra.mrb[0].mxu0 %v165
    %v237 = vpop.f32.mrb[0].mxu0
    %v238 = vadd.f32 %v161, %v237
    %v239 = vpop.f32.mrb[0].mxu0
    %240 = vdwg.mxu0
    %v241 = vxor.u32 %v238, 2147483648
    %v242 = vmul.f32 %v241, 1.442695
    %v243 = vpow.pop %v242
    %v244 = vadd.f32 %v243, 1.0
    %v245 = vrcp.pop %v244
    %v246 = vmul.f32 1.0, %v245
    %v247 = vlaneseq
    %v248 = vshrl.u32 %v247, 7
    %v249 = vsub.s32 0, %v248
    %v250 = vrot.slane %v246, %v249
    %252 = vbcast.lane.b32.xlu0 %v250, 256
    %v253 = vpop.permute.xlu0 %252
    %v254 = vlaneseq
    %v255 = vshrl.u32 %v254, 7
    %v256 = vsub.s32 1, %v255
    %v257 = vrot.slane %v246, %v256
    %259 = vbcast.lane.b32.xlu0 %v257, 256
    %v260 = vpop.permute.xlu0 %259
    %v264 = vunpack.c.l.s4 839922192
    %v265 = vunpack.c.0.s8 %v264
    %v266 = vlaneseq
    %v267 = vshrl.u32 %v266, 7
    %v268 = vsub.s32 %v265, %v267
    %v269 = vrot.slane %v253, %v268
    %v271 = vunpack.c.l.s4 839922192
    %v272 = vunpack.c.0.s8 %v271
    %v273 = vlaneseq
    %v274 = vshrl.u32 %v273, 7
    %v275 = vsub.s32 %v272, %v274
    %v276 = vrot.slane %v260, %v275
    %v279 = vmul.f32 %v35, %v269
    %v280 = vmul.f32 %v36, %v276
    %281 = vst [vmem:[#allocation5] sm:$0xff] %v279
    %282 = vst [vmem:[#allocation5 + $0x8] sm:$0xff] %v280
    // Predicated region
    $region26: #{tpu_custom_call.1} parent=1 // pred_check
      _
    $region27: #{tpu_custom_call.1} parent=1 // pred_check_branch
      %284 = sbr.rel (0) target = $region29
    $region28: #{tpu_custom_call.1} parent=1 // pred_region
      %s286 = ssub.s32 256, 256
      %287 = vsyncadd [#allocation4], %s286
      %s288 = sshll.u32 [#allocation5], 4
      %s289 = int_to_ptr.vmem [resolvable:$true] %s288
      %294 = dma.vmem_to_hbm [thread:$0]  %s289, 256, %s5, [#allocation4], 128, 128, 8
    $region29: #{tpu_custom_call.1} parent=1 // pred_fallthru
      _
    // Predicated region
    $region30: #{tpu_custom_call.1} parent=1 // pred_check
      _
    $region31: #{tpu_custom_call.1} parent=1 // pred_check_branch
      %296 = sbr.rel (0) target = $region33
    $region32: #{tpu_custom_call.1} parent=1 // pred_region
      %297 = dma.done [#allocation4], 256
    $region33: #{tpu_custom_call.1} parent=1 // pred_fallthru
      _
    %298 = vsyncpa [#allocation3], 1
    %299 = vsyncpa [#allocation4], 1

</llo_original>
